<compile_context>
chip_gen: v5e
topology: v5e:2x2
jax: 0.10.0
libtpu: 0.0.40
codegen_flags: <defaults>
</compile_context>

<pallas_src>
import math

import jax
import jax.numpy as jnp
import numpy as np
from jax import lax
from jax.experimental import pallas as pl
from jax.experimental.pallas import tpu as pltpu  # noqa: F401  (TPU backend)

# ----------------------------- model dims -----------------------------------
B = 2         # batch
T_SRC = 16    # encoder (source) time steps
D_IN = 8      # raw feature dim
D_MODEL = 32  # model dim
T_DST = 8     # decoder (target) time steps
VOCAB = 16    # output vocabulary
V_PAD = 128   # lane-dense padded vocab width for the logits store

# On v5e/v6e, set to jnp.bfloat16 for the native MXU input path (keep the f32
# accumulate via preferred_element_type); loosen the test tolerance if you do.
MXU_DTYPE = jnp.float32


def _mxu(a):
    return a.astype(MXU_DTYPE)


# ----------------------------- fused Pallas kernel ---------------------------
def seq2seq_kernel(x_ref, wenc_ref, benc_ref, emb_ref, pmask_ref, dmask_ref,
                   wqkvo_ref, wout_ref, bout_ref, o_ref):
    """Fused encoder (relu(x@Wenc+b)) + masked cross-attention decoder + vocab proj.

    Single grid point: every operand is a full VMEM-resident block (working
    set is KiB-scale on all generations). B is folded into the sublane axis
    for all projections; the (T_DST, T_SRC) attention blocks are unrolled.
    """
    f32 = jnp.float32

    # ---- encoder ------------------------------------------------------------
    x = x_ref[...]                                                # (B*T_SRC, D_IN)
    enc = jnp.dot(_mxu(x), _mxu(wenc_ref[...]), preferred_element_type=f32)
    enc = jnp.maximum(enc + benc_ref[...], 0.0)                   # (B*T_SRC, D_MODEL)

    emb = emb_ref[...]                                            # (B*T_DST, D_MODEL)

    # ---- packed attention weights: one lane-dense (D_MODEL, 4*D_MODEL) slab -
    wqkvo = wqkvo_ref[...]                                        # (32, 128)
    wq = wqkvo[:, 0 * D_MODEL:1 * D_MODEL]
    wk = wqkvo[:, 1 * D_MODEL:2 * D_MODEL]
    wv = wqkvo[:, 2 * D_MODEL:3 * D_MODEL]
    wo = wqkvo[:, 3 * D_MODEL:4 * D_MODEL]

    # Batched projections (B folded into sublanes: M = B*T).
    q_all = jnp.dot(_mxu(emb), _mxu(wq), preferred_element_type=f32)  # (B*T_DST, D)
    k_all = jnp.dot(_mxu(enc), _mxu(wk), preferred_element_type=f32)  # (B*T_SRC, D)
    v_all = jnp.dot(_mxu(enc), _mxu(wv), preferred_element_type=f32)  # (B*T_SRC, D)

    scale = 1.0 / math.sqrt(D_MODEL)
    ctx_parts = []
    for b in range(B):  # static unroll, B == 2
        q_b = q_all[b * T_DST:(b + 1) * T_DST, :]                 # (T_DST, D)
        k_b = k_all[b * T_SRC:(b + 1) * T_SRC, :]                 # (T_SRC, D)
        v_b = v_all[b * T_SRC:(b + 1) * T_SRC, :]                 # (T_SRC, D)

        # Contract last dims of q and k directly (no explicit transpose).
        scores = lax.dot_general(_mxu(q_b), _mxu(k_b),
                                 (((1,), (1,)), ((), ())),
                                 preferred_element_type=f32) * scale  # (T_DST, T_SRC)

        pm = pmask_ref[b:b + 1, :]                                # (1, T_SRC), 1.0 = valid
        scores = jnp.where(pm > 0.0, scores, -1e9)

        # numerically-stable softmax over the source axis
        m = jnp.max(scores, axis=-1, keepdims=True)
        p = jnp.exp(scores - m)
        p = p * pl.reciprocal(jnp.sum(p, axis=-1, keepdims=True), approx=True)

        ctx_parts.append(jnp.dot(_mxu(p), _mxu(v_b), preferred_element_type=f32))

    ctx = jnp.concatenate(ctx_parts, axis=0)                      # (B*T_DST, D)

    # ---- output projection + residual + lane-dense vocab projection ---------
    h = jnp.dot(_mxu(ctx), _mxu(wo), preferred_element_type=f32) + emb
    logits = jnp.dot(_mxu(h), _mxu(wout_ref[...]), preferred_element_type=f32)
    logits = logits + bout_ref[...]                               # (B*T_DST, V_PAD)

    # zero logits at padded target positions; 128-lane store is unmasked
    o_ref[...] = (logits * dmask_ref[...]).astype(o_ref.dtype)


# ----------------------------- wrappers ---------------------------------------
def sequence_mask(lengths, max_len):
    """mask[b, t] = t < lengths[b]  (same semantics as baseline sequence_mask)."""
    return jnp.arange(max_len)[None, :] < lengths[:, None]


def seq2seq_forward(params, x, pad_mask, dst, dst_lengths):
    dst_mask = sequence_mask(dst_lengths, dst.shape[1])           # (B, T_DST) bool

    # Glue: embedding gather + layout packing (plain JAX, outside the kernel).
    emb = jnp.take(params["embed"], dst, axis=0)                  # (B, T_DST, D_MODEL)
    x2d = x.reshape(B * T_SRC, D_IN)
    emb2d = emb.reshape(B * T_DST, D_MODEL)
    pmask = pad_mask.astype(jnp.float32)                          # (B, T_SRC)
    dmask2d = dst_mask.astype(jnp.float32).reshape(B * T_DST, 1)

    # Pack wq|wk|wv|wo into one lane-dense (D_MODEL, 4*D_MODEL) = (32, 128) slab.
    wqkvo = jnp.concatenate(
        [params["wq"], params["wk"], params["wv"], params["wo"]], axis=1)
    # Pad the vocab projection to 128 lanes so the output store is unmasked.
    wout_pad = jnp.zeros((D_MODEL, V_PAD), jnp.float32).at[:, :VOCAB].set(params["wout"])
    bout_pad = jnp.zeros((1, V_PAD), jnp.float32).at[:, :VOCAB].set(params["bout"])

    logits_pad = pl.pallas_call(
        seq2seq_kernel,
        out_shape=jax.ShapeDtypeStruct((B * T_DST, V_PAD), jnp.float32),
        # No grid / BlockSpecs: a single grid point with every operand mapped
        # as one full VMEM-resident block (total working set << VMEM on
        # v5e / v6e / v7x, so no vmem_limit tuning or pipelining is needed).
    )(x2d, params["w_enc"], params["b_enc"], emb2d, pmask, dmask2d,
      wqkvo, wout_pad, bout_pad)

    return logits_pad[:, :VOCAB].reshape(B, T_DST, VOCAB)

# TODO(synk): decode() greedy autoregressive loop (host-side data-dependent
# control flow with growing dst) is not implemented as a kernel.


# ----------------------------- pure-JAX reference -----------------------------
def reference_forward(params, x, pad_mask, dst, dst_lengths):
    dst_mask = sequence_mask(dst_lengths, dst.shape[1]).astype(jnp.float32)
    enc = jnp.maximum(jnp.einsum("btd,de->bte", x, params["w_enc"]) + params["b_enc"], 0.0)
    emb = jnp.take(params["embed"], dst, axis=0)
    q = jnp.einsum("btd,de->bte", emb, params["wq"])
    k = jnp.einsum("bsd,de->bse", enc, params["wk"])
    v = jnp.einsum("bsd,de->bse", enc, params["wv"])
    scores = jnp.einsum("btd,bsd->bts", q, k) / math.sqrt(D_MODEL)
    scores = scores + (1.0 - pad_mask.astype(jnp.float32))[:, None, :] * (-1e9)
    p = jax.nn.softmax(scores, axis=-1)
    ctx = jnp.einsum("bts,bsd->btd", p, v)
    h = jnp.einsum("btd,de->bte", ctx, params["wo"]) + emb
    logits = jnp.einsum("btd,dv->btv", h, params["wout"]) + params["bout"]
    return logits * dst_mask[:, :, None]


# ----------------------------- main -------------------------------------------
if __name__ == "__main__":
    key = jax.random.PRNGKey(0)
    ks = jax.random.split(key, 10)

    params = {
        "w_enc": jax.random.normal(ks[0], (D_IN, D_MODEL), jnp.float32) * 0.1,
        "b_enc": jax.random.normal(ks[1], (1, D_MODEL), jnp.float32) * 0.01,
        "embed": jax.random.normal(ks[2], (VOCAB, D_MODEL), jnp.float32) * 0.1,
        "wq": jax.random.normal(ks[3], (D_MODEL, D_MODEL), jnp.float32) * 0.1,
        "wk": jax.random.normal(ks[4], (D_MODEL, D_MODEL), jnp.float32) * 0.1,
        "wv": jax.random.normal(ks[5], (D_MODEL, D_MODEL), jnp.float32) * 0.1,
        "wo": jax.random.normal(ks[6], (D_MODEL, D_MODEL), jnp.float32) * 0.1,
        "wout": jax.random.normal(ks[7], (D_MODEL, VOCAB), jnp.float32) * 0.1,
        "bout": jax.random.normal(ks[8], (1, VOCAB), jnp.float32) * 0.01,
    }

    x = jax.random.normal(ks[9], (B, T_SRC, D_IN), jnp.float32)
    src_lengths = jnp.array([T_SRC, 12], dtype=jnp.int32)
    pad_mask = sequence_mask(src_lengths, T_SRC)                 # (B, T_SRC) bool
    dst = jax.random.randint(jax.random.PRNGKey(1), (B, T_DST), 0, VOCAB, jnp.int32)
    dst_lengths = jnp.array([T_DST, 5], dtype=jnp.int32)

    out = seq2seq_forward(params, x, pad_mask, dst, dst_lengths)
    out = jax.block_until_ready(out)

    ref = reference_forward(params, x, pad_mask, dst, dst_lengths)
    # tolerance headroom for the approx (EUP) reciprocal in the softmax denom
    np.testing.assert_allclose(np.asarray(out), np.asarray(ref), rtol=2e-3, atol=2e-3)

    print("KERNEL_OK")
</pallas_src>

<mosaic_0001>
module attributes {stable_mosaic.version = 11 : i64} {
  func.func @seq2seq_kernel(%arg0: memref<32x8xf32, #tpu.memory_space<vmem>>, %arg1: memref<8x32xf32, #tpu.memory_space<vmem>>, %arg2: memref<1x32xf32, #tpu.memory_space<vmem>>, %arg3: memref<16x32xf32, #tpu.memory_space<vmem>>, %arg4: memref<2x16xf32, #tpu.memory_space<vmem>>, %arg5: memref<16x1xf32, #tpu.memory_space<vmem>>, %arg6: memref<32x128xf32, #tpu.memory_space<vmem>>, %arg7: memref<32x128xf32, #tpu.memory_space<vmem>>, %arg8: memref<1x128xf32, #tpu.memory_space<vmem>>, %arg9: memref<16x128xf32, #tpu.memory_space<vmem>>) attributes {dimension_semantics = [], scalar_prefetch = 0 : i64, scratch_operands = 0 : i64, tpu.core_type = #tpu.core_type<tc>} {
    %c0 = arith.constant 0 : index
    %c0_0 = arith.constant 0 : index
    %0 = vector.load %arg0[%c0, %c0_0] : memref<32x8xf32, #tpu.memory_space<vmem>>, vector<32x8xf32>
    %c0_1 = arith.constant 0 : index
    %c0_2 = arith.constant 0 : index
    %1 = vector.load %arg1[%c0_1, %c0_2] : memref<8x32xf32, #tpu.memory_space<vmem>>, vector<8x32xf32>
    %cst = arith.constant dense<0.000000e+00> : vector<32x32xf32>
    %2 = tpu.matmul %0, %1, %cst {dimension_numbers = #tpu.dot_dimension_numbers<[1], [0], [0], [1], [0, 0, 1, 1], [], []>} : vector<32x8xf32>, vector<8x32xf32>, vector<32x32xf32> -> vector<32x32xf32>
    %c0_3 = arith.constant 0 : index
    %c0_4 = arith.constant 0 : index
    %3 = vector.load %arg2[%c0_3, %c0_4] : memref<1x32xf32, #tpu.memory_space<vmem>>, vector<1x32xf32>
    %4 = vector.broadcast %3 : vector<1x32xf32> to vector<32x32xf32>
    %5 = arith.addf %2, %4 : vector<32x32xf32>
    %cst_5 = arith.constant 0.000000e+00 : f32
    %6 = vector.broadcast %cst_5 : f32 to vector<32x32xf32>
    %7 = arith.maximumf %5, %6 : vector<32x32xf32>
    %c0_6 = arith.constant 0 : index
    %c0_7 = arith.constant 0 : index
    %8 = vector.load %arg3[%c0_6, %c0_7] : memref<16x32xf32, #tpu.memory_space<vmem>>, vector<16x32xf32>
    %c0_8 = arith.constant 0 : index
    %c0_9 = arith.constant 0 : index
    %9 = vector.load %arg6[%c0_8, %c0_9] : memref<32x128xf32, #tpu.memory_space<vmem>>, vector<32x128xf32>
    %10 = vector.extract_strided_slice %9 {offsets = [0, 0], sizes = [32, 32], strides = [1, 1]} : vector<32x128xf32> to vector<32x32xf32>
    %11 = vector.extract_strided_slice %9 {offsets = [0, 32], sizes = [32, 32], strides = [1, 1]} : vector<32x128xf32> to vector<32x32xf32>
    %12 = vector.extract_strided_slice %9 {offsets = [0, 64], sizes = [32, 32], strides = [1, 1]} : vector<32x128xf32> to vector<32x32xf32>
    %13 = vector.extract_strided_slice %9 {offsets = [0, 96], sizes = [32, 32], strides = [1, 1]} : vector<32x128xf32> to vector<32x32xf32>
    %cst_10 = arith.constant dense<0.000000e+00> : vector<16x32xf32>
    %14 = tpu.matmul %8, %10, %cst_10 {dimension_numbers = #tpu.dot_dimension_numbers<[1], [0], [0], [1], [0, 0, 1, 1], [], []>} : vector<16x32xf32>, vector<32x32xf32>, vector<16x32xf32> -> vector<16x32xf32>
    %cst_11 = arith.constant dense<0.000000e+00> : vector<32x32xf32>
    %15 = tpu.matmul %7, %11, %cst_11 {dimension_numbers = #tpu.dot_dimension_numbers<[1], [0], [0], [1], [0, 0, 1, 1], [], []>} : vector<32x32xf32>, vector<32x32xf32>, vector<32x32xf32> -> vector<32x32xf32>
    %cst_12 = arith.constant dense<0.000000e+00> : vector<32x32xf32>
    %16 = tpu.matmul %7, %12, %cst_12 {dimension_numbers = #tpu.dot_dimension_numbers<[1], [0], [0], [1], [0, 0, 1, 1], [], []>} : vector<32x32xf32>, vector<32x32xf32>, vector<32x32xf32> -> vector<32x32xf32>
    %17 = vector.extract_strided_slice %14 {offsets = [0, 0], sizes = [8, 32], strides = [1, 1]} : vector<16x32xf32> to vector<8x32xf32>
    %18 = vector.extract_strided_slice %15 {offsets = [0, 0], sizes = [16, 32], strides = [1, 1]} : vector<32x32xf32> to vector<16x32xf32>
    %19 = vector.extract_strided_slice %16 {offsets = [0, 0], sizes = [16, 32], strides = [1, 1]} : vector<32x32xf32> to vector<16x32xf32>
    %cst_13 = arith.constant dense<0.000000e+00> : vector<8x16xf32>
    %20 = tpu.matmul %17, %18, %cst_13 {dimension_numbers = #tpu.dot_dimension_numbers<[1], [1], [0], [0], [0, 0, 1, 0], [], []>} : vector<8x32xf32>, vector<16x32xf32>, vector<8x16xf32> -> vector<8x16xf32>
    %cst_14 = arith.constant 0.176776692 : f32
    %21 = vector.broadcast %cst_14 : f32 to vector<8x16xf32>
    %22 = arith.mulf %20, %21 : vector<8x16xf32>
    %c0_15 = arith.constant 0 : index
    %c0_16 = arith.constant 0 : index
    %23 = vector.load %arg4[%c0_15, %c0_16] : memref<2x16xf32, #tpu.memory_space<vmem>>, vector<1x16xf32>
    %cst_17 = arith.constant 0.000000e+00 : f32
    %24 = vector.broadcast %cst_17 : f32 to vector<1x16xf32>
    %25 = arith.cmpf ogt, %23, %24 : vector<1x16xf32>
    %cst_18 = arith.constant -1.000000e+09 : f32
    %26 = vector.shape_cast %25 : vector<1x16xi1> to vector<1x16xi1>
    %27 = vector.broadcast %26 : vector<1x16xi1> to vector<8x16xi1>
    %28 = vector.broadcast %cst_18 : f32 to vector<8x16xf32>
    %29 = arith.select %27, %22, %28 : vector<8x16xi1>, vector<8x16xf32>
    %cst_19 = arith.constant dense<0xFF800000> : vector<8xf32>
    %30 = vector.multi_reduction <maximumf>, %29, %cst_19 [1] : vector<8x16xf32> to vector<8xf32>
    %31 = vector.shape_cast %30 : vector<8xf32> to vector<8x1xf32>
    %32 = vector.broadcast %31 : vector<8x1xf32> to vector<8x16xf32>
    %33 = arith.subf %29, %32 : vector<8x16xf32>
    %34 = math.exp %33 : vector<8x16xf32>
    %cst_20 = arith.constant dense<0.000000e+00> : vector<8xf32>
    %35 = vector.multi_reduction <add>, %34, %cst_20 [1] : vector<8x16xf32> to vector<8xf32>
    %36 = vector.shape_cast %35 : vector<8xf32> to vector<8x1xf32>
    %37 = tpu.reciprocal %36 {approx = true} : vector<8x1xf32> -> vector<8x1xf32>
    %38 = vector.broadcast %37 : vector<8x1xf32> to vector<8x16xf32>
    %39 = arith.mulf %34, %38 : vector<8x16xf32>
    %cst_21 = arith.constant dense<0.000000e+00> : vector<8x32xf32>
    %40 = tpu.matmul %39, %19, %cst_21 {dimension_numbers = #tpu.dot_dimension_numbers<[1], [0], [0], [1], [0, 0, 1, 1], [], []>} : vector<8x16xf32>, vector<16x32xf32>, vector<8x32xf32> -> vector<8x32xf32>
    %41 = vector.extract_strided_slice %14 {offsets = [8, 0], sizes = [8, 32], strides = [1, 1]} : vector<16x32xf32> to vector<8x32xf32>
    %42 = vector.extract_strided_slice %15 {offsets = [16, 0], sizes = [16, 32], strides = [1, 1]} : vector<32x32xf32> to vector<16x32xf32>
    %43 = vector.extract_strided_slice %16 {offsets = [16, 0], sizes = [16, 32], strides = [1, 1]} : vector<32x32xf32> to vector<16x32xf32>
    %cst_22 = arith.constant dense<0.000000e+00> : vector<8x16xf32>
    %44 = tpu.matmul %41, %42, %cst_22 {dimension_numbers = #tpu.dot_dimension_numbers<[1], [1], [0], [0], [0, 0, 1, 0], [], []>} : vector<8x32xf32>, vector<16x32xf32>, vector<8x16xf32> -> vector<8x16xf32>
    %cst_23 = arith.constant 0.176776692 : f32
    %45 = vector.broadcast %cst_23 : f32 to vector<8x16xf32>
    %46 = arith.mulf %44, %45 : vector<8x16xf32>
    %c1 = arith.constant 1 : index
    %c0_24 = arith.constant 0 : index
    %47 = vector.load %arg4[%c1, %c0_24] : memref<2x16xf32, #tpu.memory_space<vmem>>, vector<1x16xf32>
    %cst_25 = arith.constant 0.000000e+00 : f32
    %48 = vector.broadcast %cst_25 : f32 to vector<1x16xf32>
    %49 = arith.cmpf ogt, %47, %48 : vector<1x16xf32>
    %cst_26 = arith.constant -1.000000e+09 : f32
    %50 = vector.shape_cast %49 : vector<1x16xi1> to vector<1x16xi1>
    %51 = vector.broadcast %50 : vector<1x16xi1> to vector<8x16xi1>
    %52 = vector.broadcast %cst_26 : f32 to vector<8x16xf32>
    %53 = arith.select %51, %46, %52 : vector<8x16xi1>, vector<8x16xf32>
    %cst_27 = arith.constant dense<0xFF800000> : vector<8xf32>
    %54 = vector.multi_reduction <maximumf>, %53, %cst_27 [1] : vector<8x16xf32> to vector<8xf32>
    %55 = vector.shape_cast %54 : vector<8xf32> to vector<8x1xf32>
    %56 = vector.broadcast %55 : vector<8x1xf32> to vector<8x16xf32>
    %57 = arith.subf %53, %56 : vector<8x16xf32>
    %58 = math.exp %57 : vector<8x16xf32>
    %cst_28 = arith.constant dense<0.000000e+00> : vector<8xf32>
    %59 = vector.multi_reduction <add>, %58, %cst_28 [1] : vector<8x16xf32> to vector<8xf32>
    %60 = vector.shape_cast %59 : vector<8xf32> to vector<8x1xf32>
    %61 = tpu.reciprocal %60 {approx = true} : vector<8x1xf32> -> vector<8x1xf32>
    %62 = vector.broadcast %61 : vector<8x1xf32> to vector<8x16xf32>
    %63 = arith.mulf %58, %62 : vector<8x16xf32>
    %cst_29 = arith.constant dense<0.000000e+00> : vector<8x32xf32>
    %64 = tpu.matmul %63, %43, %cst_29 {dimension_numbers = #tpu.dot_dimension_numbers<[1], [0], [0], [1], [0, 0, 1, 1], [], []>} : vector<8x16xf32>, vector<16x32xf32>, vector<8x32xf32> -> vector<8x32xf32>
    %65 = tpu.concatenate %40, %64 in 0 : vector<8x32xf32>, vector<8x32xf32> -> vector<16x32xf32>
    %cst_30 = arith.constant dense<0.000000e+00> : vector<16x32xf32>
    %66 = tpu.matmul %65, %13, %cst_30 {dimension_numbers = #tpu.dot_dimension_numbers<[1], [0], [0], [1], [0, 0, 1, 1], [], []>} : vector<16x32xf32>, vector<32x32xf32>, vector<16x32xf32> -> vector<16x32xf32>
    %67 = arith.addf %66, %8 : vector<16x32xf32>
    %c0_31 = arith.constant 0 : index
    %c0_32 = arith.constant 0 : index
    %68 = vector.load %arg7[%c0_31, %c0_32] : memref<32x128xf32, #tpu.memory_space<vmem>>, vector<32x128xf32>
    %cst_33 = arith.constant dense<0.000000e+00> : vector<16x128xf32>
    %69 = tpu.matmul %67, %68, %cst_33 {dimension_numbers = #tpu.dot_dimension_numbers<[1], [0], [0], [1], [0, 0, 1, 1], [], []>} : vector<16x32xf32>, vector<32x128xf32>, vector<16x128xf32> -> vector<16x128xf32>
    %c0_34 = arith.constant 0 : index
    %c0_35 = arith.constant 0 : index
    %70 = vector.load %arg8[%c0_34, %c0_35] : memref<1x128xf32, #tpu.memory_space<vmem>>, vector<1x128xf32>
    %71 = vector.broadcast %70 : vector<1x128xf32> to vector<16x128xf32>
    %72 = arith.addf %69, %71 : vector<16x128xf32>
    %c0_36 = arith.constant 0 : index
    %c0_37 = arith.constant 0 : index
    %73 = vector.load %arg5[%c0_36, %c0_37] : memref<16x1xf32, #tpu.memory_space<vmem>>, vector<16x1xf32>
    %74 = vector.broadcast %73 : vector<16x1xf32> to vector<16x128xf32>
    %75 = arith.mulf %72, %74 : vector<16x128xf32>
    %c0_38 = arith.constant 0 : index
    %c0_39 = arith.constant 0 : index
    %76 = vector.load %arg9[%c0_38, %c0_39] : memref<16x128xf32, #tpu.memory_space<vmem>>, vector<16x128xf32>
    tpu.vector_store %arg9[%c0_38, %c0_39], %75 {strides = array<i32>} : memref<16x128xf32, #tpu.memory_space<vmem>>, vector<16x128xf32>,
    return
  }
}

</mosaic_0001>

<llo_original>
// kernel: tpu_custom_call.1
$region0: #{tpu_custom_call.1}
  #allocation0 [shape = 'u32[]', space=smem, size = 0x4, offset = 0x4, fixed_abs, tag = 'smem constant byte address 0x4 - core index']
  #allocation1 [shape = 'u32[72,128]{1,0:T(1,128)}', space=vmem, size = 0x9000, scoped, tag = 'internal scratch']
  %s0 = inlined_call_operand.vmem [shape: f32[32,8], index: 0, kind: input, shape index: {}]
  %s1 = inlined_call_operand.hbm [shape: f32[8,32], index: 1, kind: input, shape index: {}]
  %s2 = inlined_call_operand.vmem [shape: f32[1,32], index: 2, kind: input, shape index: {}]
  %s3 = inlined_call_operand.vmem [shape: f32[16,32], index: 3, kind: input, shape index: {}]
  %s4 = inlined_call_operand.vmem [shape: f32[2,16], index: 4, kind: input, shape index: {}]
  %s5 = inlined_call_operand.vmem [shape: f32[16,1], index: 5, kind: input, shape index: {}]
  %s6 = inlined_call_operand.vmem [shape: f32[32,128], index: 6, kind: input, shape index: {}]
  %s7 = inlined_call_operand.hbm [shape: f32[32,128], index: 7, kind: input, shape index: {}]
  %s8 = inlined_call_operand.vmem [shape: f32[1,128], index: 8, kind: input, shape index: {}]
  %s9 = inlined_call_operand.hbm [shape: f32[16,128], index: 9, kind: output, shape index: {}]
  %s10 = sld [smem:[#allocation0]]
  $region54: #{tpu_custom_call.1} parent=0
    _
  %s12 = ssub.s32 1, %s10
  %s13 = scalar_select 0, %s12, %s10
  $region1: #{tpu_custom_call.1} parent=0
    #allocation2 [shape = 'u8[4096]{0}', space=vmem, size = 0x1000, scoped, tag = 'input window, operand 1, single buffered']
    #allocation3 [shape = 's32[1]{0}', space=sflag, size = 0x4, scoped, tag = 'scoped memory for tpu_custom_call.1']
    #allocation4 [shape = 's32[1]{0}', space=sflag, size = 0x4, scoped, tag = 'scoped memory for tpu_custom_call.1']
    #allocation5 [shape = 'u8[16384]{0}', space=vmem, size = 0x4000, scoped, tag = 'input window, operand 7, single buffered']
    #allocation6 [shape = 's32[1]{0}', space=sflag, size = 0x4, scoped, tag = 'scoped memory for tpu_custom_call.1']
    #allocation7 [shape = 'u8[8192]{0}', space=vmem, size = 0x2000, scoped, tag = 'output window, operand 0, single buffered']
    %14 = vsyncpa [#allocation3], 0
    %15 = vsyncpa [#allocation6], 0
    %16 = vsyncpa [#allocation4], 0
    // Predicated region
    $region2: #{tpu_custom_call.1} parent=1 // pred_check
      _
    $region3: #{tpu_custom_call.1} parent=1 // pred_check_branch
      %18 = sbr.rel (0) target = $region5
    $region4: #{tpu_custom_call.1} parent=1 // pred_region
      _
    $region5: #{tpu_custom_call.1} parent=1 // pred_fallthru
      _
    // Predicated region
    $region6: #{tpu_custom_call.1} parent=1 // pred_check
      _
    $region7: #{tpu_custom_call.1} parent=1 // pred_check_branch
      %20 = sbr.rel (0) target = $region9
    $region8: #{tpu_custom_call.1} parent=1 // pred_region
      %22 = vsyncadd [#allocation3], 0
      %s24 = sshll.u32 %s1, 4
      %s25 = int_to_ptr.hbm [resolvable:$true] %s24
      %s26 = sshll.u32 [#allocation2], 4
      %s27 = int_to_ptr.vmem [resolvable:$true] %s26
      %29 = dma.hbm_to_vmem [thread:$0]  %s25, 128, %s27, [#allocation3]
    $region9: #{tpu_custom_call.1} parent=1 // pred_fallthru
      _
    // Predicated region
    $region10: #{tpu_custom_call.1} parent=1 // pred_check
      _
    $region11: #{tpu_custom_call.1} parent=1 // pred_check_branch
      %31 = sbr.rel (0) target = $region13
    $region12: #{tpu_custom_call.1} parent=1 // pred_region
      _
    $region13: #{tpu_custom_call.1} parent=1 // pred_fallthru
      _
    // Predicated region
    $region14: #{tpu_custom_call.1} parent=1 // pred_check
      _
    $region15: #{tpu_custom_call.1} parent=1 // pred_check_branch
      %33 = sbr.rel (0) target = $region17
    $region16: #{tpu_custom_call.1} parent=1 // pred_region
      _
    $region17: #{tpu_custom_call.1} parent=1 // pred_fallthru
      _
    // Predicated region
    $region18: #{tpu_custom_call.1} parent=1 // pred_check
      _
    $region19: #{tpu_custom_call.1} parent=1 // pred_check_branch
      %35 = sbr.rel (0) target = $region21
    $region20: #{tpu_custom_call.1} parent=1 // pred_region
      _
    $region21: #{tpu_custom_call.1} parent=1 // pred_fallthru
      _
    // Predicated region
    $region22: #{tpu_custom_call.1} parent=1 // pred_check
      _
    $region23: #{tpu_custom_call.1} parent=1 // pred_check_branch
      %37 = sbr.rel (0) target = $region25
    $region24: #{tpu_custom_call.1} parent=1 // pred_region
      _
    $region25: #{tpu_custom_call.1} parent=1 // pred_fallthru
      _
    // Predicated region
    $region26: #{tpu_custom_call.1} parent=1 // pred_check
      _
    $region27: #{tpu_custom_call.1} parent=1 // pred_check_branch
      %39 = sbr.rel (0) target = $region29
    $region28: #{tpu_custom_call.1} parent=1 // pred_region
      _
    $region29: #{tpu_custom_call.1} parent=1 // pred_fallthru
      _
    // Predicated region
    $region30: #{tpu_custom_call.1} parent=1 // pred_check
      _
    $region31: #{tpu_custom_call.1} parent=1 // pred_check_branch
      %41 = sbr.rel (0) target = $region33
    $region32: #{tpu_custom_call.1} parent=1 // pred_region
      %43 = vsyncadd [#allocation6], 0
      %s44 = sshll.u32 %s7, 4
      %s45 = int_to_ptr.hbm [resolvable:$true] %s44
      %s46 = sshll.u32 [#allocation5], 4
      %s47 = int_to_ptr.vmem [resolvable:$true] %s46
      %52 = dma.hbm_to_vmem [thread:$0]  %s45, 512, %s47, [#allocation6], 128, 128, 8
    $region33: #{tpu_custom_call.1} parent=1 // pred_fallthru
      _
    // Predicated region
    $region34: #{tpu_custom_call.1} parent=1 // pred_check
      _
    $region35: #{tpu_custom_call.1} parent=1 // pred_check_branch
      %54 = sbr.rel (0) target = $region37
    $region36: #{tpu_custom_call.1} parent=1 // pred_region
      _
    $region37: #{tpu_custom_call.1} parent=1 // pred_fallthru
      _
    // Predicated region
    $region38: #{tpu_custom_call.1} parent=1 // pred_check
      _
    $region39: #{tpu_custom_call.1} parent=1 // pred_check_branch
      %56 = sbr.rel (0) target = $region41
    $region40: #{tpu_custom_call.1} parent=1 // pred_region
      %58 = dma.done [#allocation3], 128
    $region41: #{tpu_custom_call.1} parent=1 // pred_fallthru
      _
    // Predicated region
    $region42: #{tpu_custom_call.1} parent=1 // pred_check
      _
    $region43: #{tpu_custom_call.1} parent=1 // pred_check_branch
      %60 = sbr.rel (0) target = $region45
    $region44: #{tpu_custom_call.1} parent=1 // pred_region
      %62 = dma.done [#allocation6], 512
    $region45: #{tpu_custom_call.1} parent=1 // pred_fallthru
      _
    %v63 = vld [vmem:[%s0] sm:$0xff]
    %v64 = vld [vmem:[%s0 + $0x8] sm:$0xff]
    %v65 = vld [vmem:[%s0 + $0x10] sm:$0xff]
    %v66 = vld [vmem:[%s0 + $0x18] sm:$0xff]
    %v67 = vld [vmem:[#allocation2] sm:$0xff]
    %v68 = vld [vmem:[%s2] sm:$0x1]
    %v70 = vperm.slane %v68, 0
    %vm72 = vcmask 64512
    %v74 = vsel %vm72, %v63, 0
    %v77 = vsel %vm72, %v64, 0
    %v80 = vsel %vm72, %v65, 0
    %v83 = vsel %vm72, %v66, 0
    %85 = vmatpush.msra.mxu0 0.0
    %86 = vmatpush.msra.mxu0 0.0
    %87 = vmatpush.msra.mxu0 0.0
    %88 = vmatpush.msra.mxu0 0.0
    %89 = vmatpush.msra.mxu0 0.0
    %90 = vmatpush.msra.mxu0 0.0
    %91 = vmatpush.msra.mxu0 0.0
    %92 = vmatpush.msra.mxu0 0.0
    %93 = vmatpush.msra.mxu0 0.0
    %94 = vmatpush.msra.mxu0 0.0
    %95 = vmatpush.msra.mxu0 0.0
    %96 = vmatpush.msra.mxu0 0.0
    %97 = vmatpush.msra.mxu0 0.0
    %98 = vmatpush.msra.mxu0 0.0
    %99 = vmatpush.msra.mxu0 0.0
    %100 = vmatpush.msra.mxu0 %v67
    %101 = vmatmul.f32.gmra.mxu0 %v74
    %v102 = vpop.f32.mrf.mxu0
    %v103 = vadd.f32 %v70, %v102
    %104 = vmatmul.f32.gmra.mxu0 %v77
    %v105 = vpop.f32.mrf.mxu0
    %v106 = vadd.f32 %v70, %v105
    %107 = vmatmul.f32.gmra.mxu0 %v80
    %v108 = vpop.f32.mrf.mxu0
    %v109 = vadd.f32 %v70, %v108
    %110 = vmatmul.f32.gmra.mxu0 %v83
    %v111 = vpop.f32.mrf.mxu0
    %v112 = vadd.f32 %v70, %v111
    %113 = vdwg.mxu0
    %v114 = vmax.f32 %v103, 0.0
    %v115 = vmax.f32 %v106, 0.0
    %v116 = vmax.f32 %v109, 0.0
    %v117 = vmax.f32 %v112, 0.0
    %v118 = vld [vmem:[%s3] sm:$0xff]
    %v119 = vld [vmem:[%s3 + $0x8] sm:$0xff]
    %v120 = vld [vmem:[%s6] sm:$0xff]
    %v121 = vld [vmem:[%s6 + $0x8] sm:$0xff]
    %v122 = vld [vmem:[%s6 + $0x10] sm:$0xff]
    %v123 = vld [vmem:[%s6 + $0x18] sm:$0xff]
    %vm124 = vcmask 261120
    %v126 = vsel %vm124, %v118, 0
    %v129 = vsel %vm124, %v119, 0
    %131 = vmatpush.msra.mxu0 0.0
    %132 = vmatpush.msra.mxu0 0.0
    %133 = vmatpush.msra.mxu0 0.0
    %134 = vmatpush.msra.mxu0 0.0
    %135 = vmatpush.msra.mxu0 0.0
    %136 = vmatpush.msra.mxu0 0.0
    %137 = vmatpush.msra.mxu0 0.0
    %138 = vmatpush.msra.mxu0 0.0
    %139 = vmatpush.msra.mxu0 0.0
    %140 = vmatpush.msra.mxu0 0.0
    %141 = vmatpush.msra.mxu0 0.0
    %142 = vmatpush.msra.mxu0 0.0
    %143 = vmatpush.msra.mxu0 %v123
    %144 = vmatpush.msra.mxu0 %v122
    %145 = vmatpush.msra.mxu0 %v121
    %146 = vmatpush.msra.mxu0 %v120
    %147 = vmatmul.f32.gmra.mxu0 %v126
    %v148 = vpop.f32.mrf.mxu0
    %v149 = vadd.f32 0.0, %v148
    %150 = vmatmul.f32.gmra.mxu0 %v129
    %v151 = vpop.f32.mrf.mxu0
    %v152 = vadd.f32 0.0, %v151
    %153 = vdwg.mxu0
    %158 = vrot.lane.b32.xlu0 %v120, 96
    %v159 = vpop.permute.xlu0 %158
    %160 = vrot.lane.b32.xlu0 %v121, 96
    %v161 = vpop.permute.xlu0 %160
    %162 = vrot.lane.b32.xlu0 %v122, 96
    %v163 = vpop.permute.xlu0 %162
    %164 = vrot.lane.b32.xlu0 %v123, 96
    %v165 = vpop.permute.xlu0 %164
    %v171 = vsel %vm124, %v114, 0
    %v174 = vsel %vm124, %v115, 0
    %v177 = vsel %vm124, %v116, 0
    %v180 = vsel %vm124, %v117, 0
    %182 = vmatpush.msra.mxu0 0.0
    %183 = vmatpush.msra.mxu0 0.0
    %184 = vmatpush.msra.mxu0 0.0
    %185 = vmatpush.msra.mxu0 0.0
    %186 = vmatpush.msra.mxu0 0.0
    %187 = vmatpush.msra.mxu0 0.0
    %188 = vmatpush.msra.mxu0 0.0
    %189 = vmatpush.msra.mxu0 0.0
    %190 = vmatpush.msra.mxu0 0.0
    %191 = vmatpush.msra.mxu0 0.0
    %192 = vmatpush.msra.mxu0 0.0
    %193 = vmatpush.msra.mxu0 0.0
    %194 = vmatpush.msra.mxu0 %v165
    %195 = vmatpush.msra.mxu0 %v163
    %196 = vmatpush.msra.mxu0 %v161
    %197 = vmatpush.msra.mxu0 %v159
    %198 = vmatmul.f32.gmra.mxu0 %v171
    %v199 = vpop.f32.mrf.mxu0
    %v200 = vadd.f32 0.0, %v199
    %201 = vmatmul.f32.gmra.mxu0 %v174
    %v202 = vpop.f32.mrf.mxu0
    %v203 = vadd.f32 0.0, %v202
    %204 = vmatmul.f32.gmra.mxu0 %v177
    %v205 = vpop.f32.mrf.mxu0
    %v206 = vadd.f32 0.0, %v205
    %207 = vmatmul.f32.gmra.mxu0 %v180
    %v208 = vpop.f32.mrf.mxu0
    %v209 = vadd.f32 0.0, %v208
    %210 = vdwg.mxu0
    %211 = vrot.lane.b32.xlu0 %v120, 64
    %v212 = vpop.permute.xlu0 %211
    %213 = vrot.lane.b32.xlu0 %v121, 64
    %v214 = vpop.permute.xlu0 %213
    %215 = vrot.lane.b32.xlu0 %v122, 64
    %v216 = vpop.permute.xlu0 %215
    %217 = vrot.lane.b32.xlu0 %v123, 64
    %v218 = vpop.permute.xlu0 %217
    %223 = vmatpush.msra.mxu0 0.0
    %224 = vmatpush.msra.mxu0 0.0
    %225 = vmatpush.msra.mxu0 0.0
    %226 = vmatpush.msra.mxu0 0.0
    %227 = vmatpush.msra.mxu0 0.0
    %228 = vmatpush.msra.mxu0 0.0
    %229 = vmatpush.msra.mxu0 0.0
    %230 = vmatpush.msra.mxu0 0.0
    %231 = vmatpush.msra.mxu0 0.0
    %232 = vmatpush.msra.mxu0 0.0
    %233 = vmatpush.msra.mxu0 0.0
    %234 = vmatpush.msra.mxu0 0.0
    %235 = vmatpush.msra.mxu0 %v218
    %236 = vmatpush.msra.mxu0 %v216
    %237 = vmatpush.msra.mxu0 %v214
    %238 = vmatpush.msra.mxu0 %v212
    %239 = vmatmul.f32.gmra.mxu0 %v171
    %v240 = vpop.f32.mrf.mxu0
    %v241 = vadd.f32 0.0, %v240
    %242 = vmatmul.f32.gmra.mxu0 %v174
    %v243 = vpop.f32.mrf.mxu0
    %v244 = vadd.f32 0.0, %v243
    %245 = vmatmul.f32.gmra.mxu0 %v177
    %v246 = vpop.f32.mrf.mxu0
    %v247 = vadd.f32 0.0, %v246
    %248 = vmatmul.f32.gmra.mxu0 %v180
    %v249 = vpop.f32.mrf.mxu0
    %v250 = vadd.f32 0.0, %v249
    %251 = vdwg.mxu0
    %v253 = vsel %vm124, %v149, 0
    %v256 = vsel %vm124, %v200, 0
    %v259 = vsel %vm124, %v203, 0
    %261 = vmatpush.xpose.msra.mxu0 0.0
    %262 = vmatpush.xpose.msra.mxu0 0.0
    %263 = vmatpush.xpose.msra.mxu0 0.0
    %264 = vmatpush.xpose.msra.mxu0 0.0
    %265 = vmatpush.xpose.msra.mxu0 0.0
    %266 = vmatpush.xpose.msra.mxu0 0.0
    %267 = vmatpush.xpose.msra.mxu0 0.0
    %268 = vmatpush.xpose.msra.mxu0 0.0
    %269 = vmatpush.xpose.msra.mxu0 0.0
    %270 = vmatpush.xpose.msra.mxu0 0.0
    %271 = vmatpush.xpose.msra.mxu0 0.0
    %272 = vmatpush.xpose.msra.mxu0 0.0
    %273 = vmatpush.xpose.msra.mxu0 0.0
    %274 = vmatpush.xpose.msra.mxu0 0.0
    %275 = vmatpush.xpose.msra.mxu0 %v259
    %276 = vmatpush.xpose.msra.mxu0 %v256
    %277 = vmatmul.f32.gmra.mxu0 %v253
    %v278 = vpop.f32.mrf.mxu0
    %v279 = vadd.f32 0.0, %v278
    %280 = vdwg.mxu0
    %v281 = vmul.f32 %v279, 0.17677669
    %v282 = vld [vmem:[%s4] sm:$0x1]
    %vm283 = vcmp.gt.f32.partialorder %v282, 0.0
    %v284 = vsel %vm283, 1, 0
    %v285 = vperm.slane %v284, 0
    %vm286 = vcmp.eq.s32.totalorder %v285, 1
    %v287 = vsel %vm286, %v281, -1e+09
    %vm288 = vcmask 130048
    %v289 = vsel %vm288, %v287, -inf
    %290 = vmax.xlane.f32.xlu0 %v289
    %v291 = vpop.xlane.xlu0 %290
    %v292 = vsub.f32 %v287, %v291
    %v293 = vmul.f32 %v292, 1.442695
    %v294 = vpow.pop %v293
    %v295 = vsel %vm288, %v294, 0.0
    %296 = vadd.xlane.f32.xlu0 %v295
    %v297 = vpop.xlane.xlu0 %296
    %v298 = vrcp.pop %v297
    %v299 = vmul.f32 %v294, %v298
    %v301 = vsel %vm288, %v299, 0
    %303 = vmatpush.msra.mxu0 0.0
    %304 = vmatpush.msra.mxu0 0.0
    %305 = vmatpush.msra.mxu0 0.0
    %306 = vmatpush.msra.mxu0 0.0
    %307 = vmatpush.msra.mxu0 0.0
    %308 = vmatpush.msra.mxu0 0.0
    %309 = vmatpush.msra.mxu0 0.0
    %310 = vmatpush.msra.mxu0 0.0
    %311 = vmatpush.msra.mxu0 0.0
    %312 = vmatpush.msra.mxu0 0.0
    %313 = vmatpush.msra.mxu0 0.0
    %314 = vmatpush.msra.mxu0 0.0
    %315 = vmatpush.msra.mxu0 0.0
    %316 = vmatpush.msra.mxu0 0.0
    %317 = vmatpush.msra.mxu0 %v244
    %318 = vmatpush.msra.mxu0 %v241
    %319 = vmatmul.f32.gmra.mxu0 %v301
    %v320 = vpop.f32.mrf.mxu0
    %v321 = vadd.f32 0.0, %v320
    %322 = vdwg.mxu0
    %v324 = vsel %vm124, %v152, 0
    %v327 = vsel %vm124, %v206, 0
    %v330 = vsel %vm124, %v209, 0
    %332 = vmatpush.xpose.msra.mxu0 0.0
    %333 = vmatpush.xpose.msra.mxu0 0.0
    %334 = vmatpush.xpose.msra.mxu0 0.0
    %335 = vmatpush.xpose.msra.mxu0 0.0
    %336 = vmatpush.xpose.msra.mxu0 0.0
    %337 = vmatpush.xpose.msra.mxu0 0.0
    %338 = vmatpush.xpose.msra.mxu0 0.0
    %339 = vmatpush.xpose.msra.mxu0 0.0
    %340 = vmatpush.xpose.msra.mxu0 0.0
    %341 = vmatpush.xpose.msra.mxu0 0.0
    %342 = vmatpush.xpose.msra.mxu0 0.0
    %343 = vmatpush.xpose.msra.mxu0 0.0
    %344 = vmatpush.xpose.msra.mxu0 0.0
    %345 = vmatpush.xpose.msra.mxu0 0.0
    %346 = vmatpush.xpose.msra.mxu0 %v330
    %347 = vmatpush.xpose.msra.mxu0 %v327
    %348 = vmatmul.f32.gmra.mxu0 %v324
    %v349 = vpop.f32.mrf.mxu0
    %v350 = vadd.f32 0.0, %v349
    %351 = vdwg.mxu0
    %v352 = vmul.f32 %v350, 0.17677669
    %v353 = vld [vmem:[%s4 + $0x1] sm:$0x1]
    %vm354 = vcmp.gt.f32.partialorder %v353, 0.0
    %v355 = vsel %vm354, 1, 0
    %v356 = vperm.slane %v355, 0
    %vm357 = vcmp.eq.s32.totalorder %v356, 1
    %v358 = vsel %vm357, %v352, -1e+09
    %v359 = vsel %vm288, %v358, -inf
    %360 = vmax.xlane.f32.xlu0 %v359
    %v361 = vpop.xlane.xlu0 %360
    %v362 = vsub.f32 %v358, %v361
    %v363 = vmul.f32 %v362, 1.442695
    %v364 = vpow.pop %v363
    %v365 = vsel %vm288, %v364, 0.0
    %366 = vadd.xlane.f32.xlu0 %v365
    %v367 = vpop.xlane.xlu0 %366
    %v368 = vrcp.pop %v367
    %v369 = vmul.f32 %v364, %v368
    %v371 = vsel %vm288, %v369, 0
    %373 = vmatpush.msra.mxu0 0.0
    %374 = vmatpush.msra.mxu0 0.0
    %375 = vmatpush.msra.mxu0 0.0
    %376 = vmatpush.msra.mxu0 0.0
    %377 = vmatpush.msra.mxu0 0.0
    %378 = vmatpush.msra.mxu0 0.0
    %379 = vmatpush.msra.mxu0 0.0
    %380 = vmatpush.msra.mxu0 0.0
    %381 = vmatpush.msra.mxu0 0.0
    %382 = vmatpush.msra.mxu0 0.0
    %383 = vmatpush.msra.mxu0 0.0
    %384 = vmatpush.msra.mxu0 0.0
    %385 = vmatpush.msra.mxu0 0.0
    %386 = vmatpush.msra.mxu0 0.0
    %387 = vmatpush.msra.mxu0 %v250
    %388 = vmatpush.msra.mxu0 %v247
    %389 = vmatmul.f32.gmra.mxu0 %v371
    %v390 = vpop.f32.mrf.mxu0
    %v391 = vadd.f32 0.0, %v390
    %392 = vdwg.mxu0
    %393 = vrot.lane.b32.xlu0 %v120, 32
    %v394 = vpop.permute.xlu0 %393
    %395 = vrot.lane.b32.xlu0 %v121, 32
    %v396 = vpop.permute.xlu0 %395
    %397 = vrot.lane.b32.xlu0 %v122, 32
    %v398 = vpop.permute.xlu0 %397
    %399 = vrot.lane.b32.xlu0 %v123, 32
    %v400 = vpop.permute.xlu0 %399
    %v406 = vsel %vm124, %v321, 0
    %v409 = vsel %vm124, %v391, 0
    %411 = vmatpush.msra.mxu0 0.0
    %412 = vmatpush.msra.mxu0 0.0
    %413 = vmatpush.msra.mxu0 0.0
    %414 = vmatpush.msra.mxu0 0.0
    %415 = vmatpush.msra.mxu0 0.0
    %416 = vmatpush.msra.mxu0 0.0
    %417 = vmatpush.msra.mxu0 0.0
    %418 = vmatpush.msra.mxu0 0.0
    %419 = vmatpush.msra.mxu0 0.0
    %420 = vmatpush.msra.mxu0 0.0
    %421 = vmatpush.msra.mxu0 0.0
    %422 = vmatpush.msra.mxu0 0.0
    %423 = vmatpush.msra.mxu0 %v400
    %424 = vmatpush.msra.mxu0 %v398
    %425 = vmatpush.msra.mxu0 %v396
    %426 = vmatpush.msra.mxu0 %v394
    %427 = vmatmul.f32.gmra.mxu0 %v406
    %v428 = vpop.f32.mrf.mxu0
    %v429 = vadd.f32 %v118, %v428
    %430 = vmatmul.f32.gmra.mxu0 %v409
    %v431 = vpop.f32.mrf.mxu0
    %v432 = vadd.f32 %v119, %v431
    %433 = vdwg.mxu0
    %v434 = vld [vmem:[#allocation5] sm:$0xff]
    %v435 = vld [vmem:[#allocation5 + $0x8] sm:$0xff]
    %v436 = vld [vmem:[#allocation5 + $0x10] sm:$0xff]
    %v437 = vld [vmem:[#allocation5 + $0x18] sm:$0xff]
    %v438 = vld [vmem:[%s8] sm:$0x1]
    %v440 = vperm.slane %v438, 0
    %v443 = vsel %vm124, %v429, 0
    %v446 = vsel %vm124, %v432, 0
    %448 = vmatpush.msra.mxu0 0.0
    %449 = vmatpush.msra.mxu0 0.0
    %450 = vmatpush.msra.mxu0 0.0
    %451 = vmatpush.msra.mxu0 0.0
    %452 = vmatpush.msra.mxu0 0.0
    %453 = vmatpush.msra.mxu0 0.0
    %454 = vmatpush.msra.mxu0 0.0
    %455 = vmatpush.msra.mxu0 0.0
    %456 = vmatpush.msra.mxu0 0.0
    %457 = vmatpush.msra.mxu0 0.0
    %458 = vmatpush.msra.mxu0 0.0
    %459 = vmatpush.msra.mxu0 0.0
    %460 = vmatpush.msra.mxu0 %v437
    %461 = vmatpush.msra.mxu0 %v436
    %462 = vmatpush.msra.mxu0 %v435
    %463 = vmatpush.msra.mxu0 %v434
    %464 = vmatmul.f32.gmra.mxu0 %v443
    %v465 = vpop.f32.mrf.mxu0
    %v466 = vadd.f32 %v440, %v465
    %467 = vmatmul.f32.gmra.mxu0 %v446
    %v468 = vpop.f32.mrf.mxu0
    %v469 = vadd.f32 %v440, %v468
    %470 = vdwg.mxu0
    %v471 = vld [vmem:[%s5] sm:$0xff]
    %v472 = vld [vmem:[%s5 + $0x8] sm:$0xff]
    %474 = vset.pattern.permute.xlu0 0
    %475 = vperm.xlu0 %474, %v471
    %v476 = vpop.permute.xlu0 %475
    %479 = vset.pattern.permute.xlu0 0
    %480 = vperm.xlu0 %479, %v472
    %v481 = vpop.permute.xlu0 %480
    %v483 = vmul.f32 %v466, %v476
    %v484 = vmul.f32 %v469, %v481
    %485 = vst [vmem:[#allocation7] sm:$0xff] %v483
    %486 = vst [vmem:[#allocation7 + $0x8] sm:$0xff] %v484
    // Predicated region
    $region46: #{tpu_custom_call.1} parent=1 // pred_check
      _
    $region47: #{tpu_custom_call.1} parent=1 // pred_check_branch
      %488 = sbr.rel (0) target = $region49
    $region48: #{tpu_custom_call.1} parent=1 // pred_region
      %490 = vsyncadd [#allocation4], 0
      %s491 = sshll.u32 [#allocation7], 4
      %s492 = int_to_ptr.vmem [resolvable:$true] %s491
      %s493 = sshll.u32 %s9, 4
      %s494 = int_to_ptr.hbm [resolvable:$true] %s493
      %499 = dma.vmem_to_hbm [thread:$0]  %s492, 256, %s494, [#allocation4], 128, 128, 8
    $region49: #{tpu_custom_call.1} parent=1 // pred_fallthru
      _
    // Predicated region
    $region50: #{tpu_custom_call.1} parent=1 // pred_check
      _
    $region51: #{tpu_custom_call.1} parent=1 // pred_check_branch
      %501 = sbr.rel (0) target = $region53
    $region52: #{tpu_custom_call.1} parent=1 // pred_region
      %503 = dma.done [#allocation4], 256
    $region53: #{tpu_custom_call.1} parent=1 // pred_fallthru
      _
    %504 = vsyncpa [#allocation3], 1
    %505 = vsyncpa [#allocation6], 1
    %506 = vsyncpa [#allocation4], 1

</llo_original>
